<compile_context>
chip_gen: v6e
topology: v6e:2x2x1
jax: 0.10.0
libtpu: 0.0.40
codegen_flags: <defaults>
</compile_context>

<pallas_src>
import functools

import jax
import jax.numpy as jnp
from jax.experimental import pallas as pl
from jax.experimental.pallas import tpu as pltpu


def _stochastic_depth_kernel(u_ref, x_ref, o_ref, *, drop_prob):
    # u_ref: (TB, 1) float32 uniforms, one per batch row of this tile.
    # mask = (u > p) / p, computed in float32.
    scale = jnp.where(
        u_ref[...] > drop_prob,
        jnp.float32(1.0 / drop_prob),
        jnp.float32(0.0),
    )  # (TB, 1) f32, broadcasts along the lane (hidden) axis.
    o_ref[...] = (x_ref[...].astype(jnp.float32) * scale).astype(o_ref.dtype)


def _pick_tile(dim, preferred, align):
    """Full extent if the dim is small; otherwise the preferred aligned tile."""
    if dim <= preferred:
        return dim                      # full-extent blocks are always legal
    return max(align, (preferred // align) * align)


def stochastic_depth(x, key, *, drop_path_prob=0.5, training=True,
                     block_b=None, block_h=None):
    """Stochastic depth / drop-path.

    x:   (B, H) activations (f32 or bf16).
    key: jax.random key for the per-row uniform draw (== torch.rand((B, 1))).
    """
    if drop_path_prob == 0.0 or not training:
        return x

    B, H = x.shape
    # One uniform per batch row, exactly like torch.rand((B, 1)).
    u = jax.random.uniform(key, (B, 1), dtype=jnp.float32)

    # Tile sizes: batch -> sublanes (multiple of 8), hidden -> lanes
    # (multiple of 128, wide for unmasked full-width vector stores).
    # Defaults keep ~1 MiB/buffer (f32), well inside scoped VMEM on v5e/v6e/v7x
    # even with double-buffered input + output tiles.
    tb = block_b if block_b is not None else _pick_tile(B, 256, 8)
    th = block_h if block_h is not None else _pick_tile(H, 1024, 128)
    grid = (pl.cdiv(B, tb), pl.cdiv(H, th))

    kernel = functools.partial(_stochastic_depth_kernel,
                               drop_prob=float(drop_path_prob))
    return pl.pallas_call(
        kernel,
        out_shape=jax.ShapeDtypeStruct(x.shape, x.dtype),
        grid=grid,
        in_specs=[
            # Per-row uniforms: indexed only by the batch-grid axis, so the
            # same mask block is reused for every hidden tile of that row.
            pl.BlockSpec((tb, 1), lambda i, j: (i, 0)),
            pl.BlockSpec((tb, th), lambda i, j: (i, j)),
        ],
        out_specs=pl.BlockSpec((tb, th), lambda i, j: (i, j)),
        compiler_params=pltpu.CompilerParams(
            dimension_semantics=("parallel", "parallel")),
    )(u, x)


if __name__ == "__main__":
    key = jax.random.PRNGKey(0)
    x_key, mask_key = jax.random.split(key)

    B, H = 16, 256          # hidden_size=256 in SiDConfig; small batch
    p = 0.5                 # drop_path_prob default in SiDConfig
    x = jax.random.normal(x_key, (B, H), dtype=jnp.float32)

    # Eval / p == 0 path: identity (module returns the input unchanged).
    y_eval = stochastic_depth(x, mask_key, drop_path_prob=p, training=False)
    assert jnp.array_equal(y_eval, x)

    # Training path: force small tiles so the 2x2 grid is exercised and the
    # per-row mask must stay consistent across hidden tiles.
    y = stochastic_depth(x, mask_key, drop_path_prob=p, training=True,
                         block_b=8, block_h=128)
    y = jax.block_until_ready(y)

    # Reference: same per-row uniforms, same (u > p)/p rule as the module.
    u = jax.random.uniform(mask_key, (B, 1), dtype=jnp.float32)
    mask = (u > p).astype(x.dtype) / p
    ref = mask * x
    assert jnp.allclose(y, ref, rtol=1e-6, atol=1e-6), "mismatch vs reference"

    # Structural sanity: every row is either dropped (all zeros) or scaled 1/p.
    for i in range(B):
        row = y[i]
        ok = bool(jnp.all(row == 0.0)) or bool(
            jnp.allclose(row, x[i] / p, rtol=1e-6, atol=1e-6))
        assert ok, f"row {i} neither dropped nor scaled by 1/p"

    # Default (large, lane-dense) tiling path also runs clean and agrees.
    y2 = jax.block_until_ready(
        stochastic_depth(x, mask_key, drop_path_prob=p, training=True))
    assert jnp.allclose(y2, ref, rtol=1e-6, atol=1e-6)

    print("KERNEL_OK")
</pallas_src>

<mosaic_0001>
module attributes {stable_mosaic.version = 11 : i64} {
  func.func @_stochastic_depth_kernel(%arg0: i32, %arg1: i32, %arg2: memref<8x1xf32, #tpu.memory_space<vmem>>, %arg3: memref<8x128xf32, #tpu.memory_space<vmem>>, %arg4: memref<8x128xf32, #tpu.memory_space<vmem>>) attributes {dimension_semantics = [#tpu.dimension_semantics<parallel>, #tpu.dimension_semantics<parallel>], iteration_bounds = array<i64: 2, 2>, scalar_prefetch = 0 : i64, scratch_operands = 0 : i64, tpu.core_type = #tpu.core_type<tc>, window_params = [{transform_indices = @transform_0, window_bounds = array<i64: 8, 1>}, {transform_indices = @transform_1, window_bounds = array<i64: 8, 128>}, {transform_indices = @transform_2, window_bounds = array<i64: 8, 128>}]} {
    %c0 = arith.constant 0 : index
    %c0_0 = arith.constant 0 : index
    %0 = vector.load %arg2[%c0, %c0_0] : memref<8x1xf32, #tpu.memory_space<vmem>>, vector<8x1xf32>
    %cst = arith.constant 5.000000e-01 : f32
    %1 = vector.broadcast %cst : f32 to vector<8x1xf32>
    %2 = arith.cmpf ogt, %0, %1 : vector<8x1xf32>
    %cst_1 = arith.constant 2.000000e+00 : f32
    %cst_2 = arith.constant 0.000000e+00 : f32
    %3 = vector.broadcast %cst_1 : f32 to vector<8x1xf32>
    %4 = vector.broadcast %cst_2 : f32 to vector<8x1xf32>
    %5 = arith.select %2, %3, %4 : vector<8x1xi1>, vector<8x1xf32>
    %c0_3 = arith.constant 0 : index
    %c0_4 = arith.constant 0 : index
    %6 = vector.load %arg3[%c0_3, %c0_4] : memref<8x128xf32, #tpu.memory_space<vmem>>, vector<8x128xf32>
    %7 = vector.broadcast %5 : vector<8x1xf32> to vector<8x128xf32>
    %8 = arith.mulf %6, %7 : vector<8x128xf32>
    %c0_5 = arith.constant 0 : index
    %c0_6 = arith.constant 0 : index
    %9 = vector.load %arg4[%c0_5, %c0_6] : memref<8x128xf32, #tpu.memory_space<vmem>>, vector<8x128xf32>
    tpu.vector_store %arg4[%c0_5, %c0_6], %8 {strides = array<i32>} : memref<8x128xf32, #tpu.memory_space<vmem>>, vector<8x128xf32>,
    return
  }
  func.func @transform_0(%arg0: i32, %arg1: i32) -> (i32, i32) {
    %c0_i32 = arith.constant 0 : i32
    %c0_i32_0 = arith.constant 0 : i32
    return %arg0, %c0_i32 : i32, i32
  }
  func.func @transform_1(%arg0: i32, %arg1: i32) -> (i32, i32) {
    %c0_i32 = arith.constant 0 : i32
    return %arg0, %arg1 : i32, i32
  }
  func.func @transform_2(%arg0: i32, %arg1: i32) -> (i32, i32) {
    %c0_i32 = arith.constant 0 : i32
    return %arg0, %arg1 : i32, i32
  }
}

</mosaic_0001>

<llo_original>
// kernel: tpu_custom_call.1
$region0: #{tpu_custom_call.1}
  #allocation0 [shape = 'u32[]', space=smem, size = 0x4, offset = 0x4, fixed_abs, tag = 'smem constant byte address 0x4 - core index']
  #allocation1 [shape = 'u32[144,128]{1,0:T(1,128)}', space=vmem, size = 0x12000, scoped, tag = 'internal scratch']
  %s0 = inlined_call_operand.vmem [shape: f32[16,1], index: 0, kind: input, shape index: {}]
  %s1 = inlined_call_operand.hbm [shape: f32[16,256], index: 1, kind: input, shape index: {}]
  %s2 = inlined_call_operand.hbm [shape: f32[16,256], index: 2, kind: output, shape index: {}]
  %s3 = sld [smem:[#allocation0]]
  $region45: #{tpu_custom_call.1} parent=0
    _
  %s5 = ssub.s32 1, %s3
  %s6 = scalar_select 0, %s5, %s3
  $region1: #{tpu_custom_call.1} parent=0
    #allocation2 [shape = 'u8[8192]{0}', space=vmem, size = 0x2000, scoped, tag = 'input window, operand 1']
    #allocation3 [shape = 's32[2]{0}', space=sflag, size = 0x8, scoped, tag = 'scoped memory for tpu_custom_call.1']
    #allocation4 [shape = 's32[2]{0}', space=sflag, size = 0x8, scoped, tag = 'scoped memory for tpu_custom_call.1']
    #allocation5 [shape = 'u8[8192]{0}', space=vmem, size = 0x2000, scoped, tag = 'output window, operand 0']
    %7 = vsyncpa [#allocation3], 0
    %s8 = scalar_lea.sflag [#allocation3], 1
    %9 = vsyncpa %s8, 0
    %10 = vsyncpa [#allocation4], 0
    %s11 = scalar_lea.sflag [#allocation4], 1
    %12 = vsyncpa %s11, 0
    loop: start=0, step=1, limit=6
    $region2: #{tpu_custom_call.1} parent=1 // loop_pre_header
      _
    $region3: #{tpu_custom_call.1} parent=1 // loop_header
      %s14 = sphi 0, %s18
      %p15 = scmp.ge.s32.totalorder %s14, 6
      %s21 = sphi 0, %s33
      %s22 = sphi 0, %s29
      %s23 = sphi 0, %s21
      %s24 = sphi 0, %s22
      %s25 = sphi 0, %s23
      %s26 = sphi 0, %s24
      %s36 = sphi 0, %s38
      %s39 = sphi 0, %s36
      %s40 = sphi 0, %s39
      %s56 = sphi 0, %s40
      %s64 = sphi 0, %s66
      %s67 = sphi 0, %s64
      %s68 = sphi 0, %s67
      %s84 = sphi 0, %s68
      %s92 = sphi 0, %s94
      %s95 = sphi 0, %s92
      %s96 = sphi 0, %s95
      %s112 = sphi 0, %s96
    $region4: #{tpu_custom_call.1} parent=1 // loop_header_branch
      %17 = sbr.rel (%p15) target = $region8
    $region5: #{tpu_custom_call.1} parent=1 // loop_body
      %s19 = ssub.s32 %s14, 1
      %s20 = ssub.s32 %s14, 2
      %s27 = sadd.s32 1, %s22
      %p28 = scmp.ge.s32.totalorder %s27, 2
      %s29 = scalar_select %p28, 0, %s27
      %s30 = sadd.s32 1, %s21
      %s31 = scalar_select %p28, %s30, %s21
      %p32 = scmp.ge.s32.totalorder %s31, 2
      %s33 = scalar_select %p32, 0, %s31
      %s34 = ssub.s32 %s21, %s33
      %p35 = scmp.eq.s32.totalorder %s34, 0
      %s37 = sadd.s32 %s36, 1
      %s38 = scalar_select %p35, %s36, %s37
      %p41 = pneg %p35
      %p42 = scmp.eq.s32.totalorder %s14, 3
      %p43 = por %p41, %p42
      %p44 = scmp.ne.s32.totalorder %s36, %s39
      %p45 = scmp.eq.s32.totalorder %s14, 0
      %p46 = por %p44, %p45
      %p47 = scmp.ne.s32.totalorder %s36, %s39
      %p48 = scmp.eq.s32.totalorder %s19, 3
      %p49 = por %p47, %p48
      %p50 = scmp.ne.s32.totalorder %s39, %s40
      %p51 = scmp.eq.s32.totalorder %s19, 0
      %p52 = por %p50, %p51
      %p53 = scmp.ne.s32.totalorder %s39, %s40
      %p54 = scmp.eq.s32.totalorder %s20, 3
      %p55 = por %p53, %p54
      %p57 = scmp.ne.s32.totalorder %s40, %s56
      %p58 = scmp.eq.s32.totalorder %s20, 0
      %p59 = por %p57, %p58
      %s60 = ssub.s32 %s21, %s33
      %s61 = ssub.s32 %s22, %s29
      %s62 = sor.u32 %s60, %s61
      %p63 = scmp.eq.s32.totalorder %s62, 0
      %s65 = sadd.s32 %s64, 1
      %s66 = scalar_select %p63, %s64, %s65
      %p69 = pneg %p63
      %p70 = scmp.eq.s32.totalorder %s14, 3
      %p71 = por %p69, %p70
      %p72 = scmp.ne.s32.totalorder %s64, %s67
      %p73 = scmp.eq.s32.totalorder %s14, 0
      %p74 = por %p72, %p73
      %p75 = scmp.ne.s32.totalorder %s64, %s67
      %p76 = scmp.eq.s32.totalorder %s19, 3
      %p77 = por %p75, %p76
      %p78 = scmp.ne.s32.totalorder %s67, %s68
      %p79 = scmp.eq.s32.totalorder %s19, 0
      %p80 = por %p78, %p79
      %p81 = scmp.ne.s32.totalorder %s67, %s68
      %p82 = scmp.eq.s32.totalorder %s20, 3
      %p83 = por %p81, %p82
      %p85 = scmp.ne.s32.totalorder %s68, %s84
      %p86 = scmp.eq.s32.totalorder %s20, 0
      %p87 = por %p85, %p86
      %s88 = ssub.s32 %s21, %s33
      %s89 = ssub.s32 %s22, %s29
      %s90 = sor.u32 %s88, %s89
      %p91 = scmp.eq.s32.totalorder %s90, 0
      %s93 = sadd.s32 %s92, 1
      %s94 = scalar_select %p91, %s92, %s93
      %p97 = pneg %p91
      %p98 = scmp.eq.s32.totalorder %s14, 3
      %p99 = por %p97, %p98
      %p100 = scmp.ne.s32.totalorder %s92, %s95
      %p101 = scmp.eq.s32.totalorder %s14, 0
      %p102 = por %p100, %p101
      %p103 = scmp.ne.s32.totalorder %s92, %s95
      %p104 = scmp.eq.s32.totalorder %s19, 3
      %p105 = por %p103, %p104
      %p106 = scmp.ne.s32.totalorder %s95, %s96
      %p107 = scmp.eq.s32.totalorder %s19, 0
      %p108 = por %p106, %p107
      %p109 = scmp.ne.s32.totalorder %s95, %s96
      %p110 = scmp.eq.s32.totalorder %s20, 3
      %p111 = por %p109, %p110
      %p113 = scmp.ne.s32.totalorder %s96, %s112
      %p114 = scmp.eq.s32.totalorder %s20, 0
      %p115 = por %p113, %p114
      %p116 = scmp.le.s32.totalorder 1, %s14
      %p117 = scmp.lt.s32.totalorder %s14, 5
      %p118 = pnand %p116, %p117
      %p119 = pneg %p118
      // Predicated region
      $region9: #{tpu_custom_call.1} parent=5 // pred_check
        _
      $region10: #{tpu_custom_call.1} parent=5 // pred_check_branch
        %121 = sbr.rel (%p118) target = $region12
      $region11: #{tpu_custom_call.1} parent=5 // pred_region
        %s122 = ssub.s32 %s14, 1
      $region12: #{tpu_custom_call.1} parent=5 // pred_fallthru
        _
      %p123 = scmp.lt.s32.totalorder %s14, 4
      // Predicated region
      $region13: #{tpu_custom_call.1} parent=5 // pred_check
        %p124 = pneg %p123
      $region14: #{tpu_custom_call.1} parent=5 // pred_check_branch
        %126 = sbr.rel (%p124) target = $region16
      $region15: #{tpu_custom_call.1} parent=5 // pred_region
        // Predicated region
        $region17: #{tpu_custom_call.1} parent=15 // pred_check
          %p127 = pneg %p46
        $region18: #{tpu_custom_call.1} parent=15 // pred_check_branch
          %129 = sbr.rel (%p127) target = $region20
        $region19: #{tpu_custom_call.1} parent=15 // pred_region
          %p130 = scmp.lt.s32.totalorder %s21, 1
          %s131 = scalar_select %p130, %s21, 1
          %s132 = smul.addr %s131, 8
          %s133 = scalar_lea.vmem %s0, %s132
        $region20: #{tpu_custom_call.1} parent=15 // pred_fallthru
          _
        // Predicated region
        $region21: #{tpu_custom_call.1} parent=15 // pred_check
          %p134 = pneg %p74
        $region22: #{tpu_custom_call.1} parent=15 // pred_check_branch
          %136 = sbr.rel (%p134) target = $region24
        $region23: #{tpu_custom_call.1} parent=15 // pred_region
          %s137 = sand.u32 %s64, 1
          %s138 = scalar_lea.sflag [#allocation3], %s137
          %s139 = sand.u32 %s64, 1
          %s140 = smul.addr %s139, 8
          %s141 = scalar_lea.vmem [#allocation2], %s140
          %s143 = ssub.s32 128, 128
          %144 = vsyncadd %s138, %s143
          %s145 = smul.addr %s21, 2
          %s146 = sadd.s32 %s22, %s145
          %s147 = smul.addr %s146, 128
          %s148 = scalar_lea.hbm %s1, %s147
          %s150 = sshll.u32 %s141, 4
          %s151 = int_to_ptr.vmem [resolvable:$true] %s150
          %153 = dma.hbm_to_vmem [thread:$0]  %s148, 128, %s151, %s138
        $region24: #{tpu_custom_call.1} parent=15 // pred_fallthru
          _
      $region16: #{tpu_custom_call.1} parent=5 // pred_fallthru
        _
      %p154 = scmp.le.s32.totalorder 1, %s14
      %p155 = scmp.lt.s32.totalorder %s14, 5
      %p156 = pnand %p154, %p155
      %p157 = pneg %p156
      // Predicated region
      $region25: #{tpu_custom_call.1} parent=5 // pred_check
        _
      $region26: #{tpu_custom_call.1} parent=5 // pred_check_branch
        %159 = sbr.rel (%p156) target = $region28
      $region27: #{tpu_custom_call.1} parent=5 // pred_region
        %s160 = ssub.s32 %s14, 1
        %s161 = sand.u32 %s67, 1
        %s162 = scalar_lea.sflag [#allocation3], %s161
        %s163 = sand.u32 %s67, 1
        %s164 = smul.addr %s163, 8
        %s165 = scalar_lea.vmem [#allocation2], %s164
        // Predicated region
        $region29: #{tpu_custom_call.1} parent=27 // pred_check
          %p166 = pneg %p80
        $region30: #{tpu_custom_call.1} parent=27 // pred_check_branch
          %168 = sbr.rel (%p166) target = $region32
        $region31: #{tpu_custom_call.1} parent=27 // pred_region
          %169 = dma.done %s162, 128
        $region32: #{tpu_custom_call.1} parent=27 // pred_fallthru
          _
        %p170 = scmp.lt.s32.totalorder %s23, 1
        %s171 = scalar_select %p170, %s23, 1
        %s172 = smul.addr %s171, 8
        %s173 = scalar_lea.vmem %s0, %s172
        %p174 = pneg %p52
        %p175 = pneg %p49
        %s176 = sand.u32 %s67, 1
        %s177 = scalar_lea.sflag [#allocation3], %s176
        %s178 = sand.u32 %s67, 1
        %s179 = smul.addr %s178, 8
        %s180 = scalar_lea.vmem [#allocation2], %s179
        %p181 = pneg %p80
        %p182 = pneg %p77
        %p183 = pneg %p108
        %p184 = pneg %p105
        %s185 = sand.u32 %s95, 1
        %s186 = scalar_lea.sflag [#allocation4], %s185
        %s187 = sand.u32 %s95, 1
        %s188 = smul.addr %s187, 8
        %s189 = scalar_lea.vmem [#allocation5], %s188
        %p190 = scmp.lt.s32.totalorder %s23, 1
        %s191 = scalar_select %p190, %s23, 1
        %s192 = smul.addr %s191, 8
        %s193 = scalar_lea.vmem %s0, %s192
        %v194 = vld [vmem:[%s193] sm:$0xff]
        %vm195 = vcmp.gt.f32.partialorder %v194, 0.5
        %v196 = vsel %vm195, 2.0, 0.0
        %v197 = vld [vmem:[%s165] sm:$0xff]
        %199 = vset.pattern.permute.xlu0 0
        %200 = vperm.xlu0 %199, %v196
        %v201 = vpop.permute.xlu0 %200
        %v203 = vmul.f32 %v197, %v201
        %204 = vst [vmem:[%s189] sm:$0xff] %v203
        %s205 = sand.u32 %s95, 1
        %s206 = scalar_lea.sflag [#allocation4], %s205
        %s207 = sand.u32 %s95, 1
        %s208 = smul.addr %s207, 8
        %s209 = scalar_lea.vmem [#allocation5], %s208
        // Predicated region
        $region33: #{tpu_custom_call.1} parent=27 // pred_check
          %p210 = pneg %p105
        $region34: #{tpu_custom_call.1} parent=27 // pred_check_branch
          %212 = sbr.rel (%p210) target = $region36
        $region35: #{tpu_custom_call.1} parent=27 // pred_region
          %s214 = ssub.s32 128, 128
          %215 = vsyncadd %s206, %s214
          %s216 = smul.addr %s23, 2
          %s217 = sadd.s32 %s24, %s216
          %s218 = smul.addr %s217, 128
          %s219 = scalar_lea.hbm %s2, %s218
          %s221 = sshll.u32 %s209, 4
          %s222 = int_to_ptr.vmem [resolvable:$true] %s221
          %224 = dma.vmem_to_hbm [thread:$0]  %s222, 128, %s219, %s206
        $region36: #{tpu_custom_call.1} parent=27 // pred_fallthru
          _
      $region28: #{tpu_custom_call.1} parent=5 // pred_fallthru
        _
      %p225 = scmp.le.s32.totalorder 2, %s14
      // Predicated region
      $region37: #{tpu_custom_call.1} parent=5 // pred_check
        %p226 = pneg %p225
      $region38: #{tpu_custom_call.1} parent=5 // pred_check_branch
        %228 = sbr.rel (%p226) target = $region40
      $region39: #{tpu_custom_call.1} parent=5 // pred_region
        %s229 = ssub.s32 %s14, 2
        // Predicated region
        $region41: #{tpu_custom_call.1} parent=39 // pred_check
          %p230 = pneg %p111
        $region42: #{tpu_custom_call.1} parent=39 // pred_check_branch
          %232 = sbr.rel (%p230) target = $region44
        $region43: #{tpu_custom_call.1} parent=39 // pred_region
          %s233 = sand.u32 %s96, 1
          %s234 = scalar_lea.sflag [#allocation4], %s233
          %s235 = sand.u32 %s96, 1
          %s236 = smul.addr %s235, 8
          %s237 = scalar_lea.vmem [#allocation5], %s236
          %238 = dma.done %s234, 128
        $region44: #{tpu_custom_call.1} parent=39 // pred_fallthru
          _
      $region40: #{tpu_custom_call.1} parent=5 // pred_fallthru
        _
    $region6: #{tpu_custom_call.1} parent=1 // loop_footer
      %s18 = sadd.s32 1, %s14
    $region7: #{tpu_custom_call.1} parent=1 // loop_footer_branch
      %13 = sbr.rel target = $region3
    $region8: #{tpu_custom_call.1} parent=1 // loop_exit
      _
    %239 = vsyncpa [#allocation3], 1
    %s240 = scalar_lea.sflag [#allocation3], 1
    %241 = vsyncpa %s240, 1
    %242 = vsyncpa [#allocation4], 1
    %s243 = scalar_lea.sflag [#allocation4], 1
    %244 = vsyncpa %s243, 1

</llo_original>
